<compile_context>
chip_gen: v7x
topology: tpu7x:2x2x1
jax: 0.10.0
libtpu: 0.0.40
codegen_flags: <defaults>
</compile_context>

<pallas_src>
import functools

import numpy as np
import jax
import jax.numpy as jnp
from jax.experimental import pallas as pl
from jax.experimental.pallas import tpu as pltpu

LANE = 128
NEG_BIG = -1e30


def _round_up(x, m):
    return (x + m - 1) // m * m


def _hw_budget():
    """(max tile, vmem_limit_bytes) per TPU generation."""
    try:
        vmem = pltpu.get_tpu_info().vmem_capacity_bytes
    except Exception:
        vmem = 64 * 1024 * 1024                 # conservative (v7x-sized) fallback
    if vmem >= 100 * 1024 * 1024:               # v5e / v6e: 128 MiB physical VMEM
        return 1024, 64 * 1024 * 1024
    return 512, 32 * 1024 * 1024                # v7x: 64 MiB physical VMEM


def _choose_tiling(n, tile_cap):
    """Largest tile <= cap that still leaves >= 2 dst row blocks (megacore)."""
    n128 = _round_up(max(n, 1), LANE)
    for t in (1024, 512, 256, 128):
        if t <= tile_cap and n128 > t:
            return t, _round_up(n128, t)
    return n128, n128                           # tiny graph: single block


# --------------------------------------------------------------------------
# Kernel A: fused projection + attention terms (tiled over node rows)
# --------------------------------------------------------------------------
def gat_proj_kernel(x_ref, rhs_ref, xw_ref, snd_ref, shn_ref, *, hfp, shn_rows):
    # One fused MXU pass: rhs = [W | W@A]   (x @ (W@A) == (x@W) @ A)
    x = x_ref[...].astype(jnp.bfloat16)                          # [TM, FinP]
    y = jnp.dot(x, rhs_ref[...], preferred_element_type=jnp.float32)
    xw_ref[...] = y[:, :hfp].astype(jnp.bfloat16)                # packed xW
    s = y[:, hfp:]                                               # [TM, SP] att terms
    snd_ref[...] = s
    # transpose only the `heads` source-term columns (padded to 8 sublanes)
    shn_ref[...] = jnp.transpose(s[:, :shn_rows])                # [shn_rows, TM]


# --------------------------------------------------------------------------
# Kernel B: flash-style masked softmax + aggregation (online softmax)
# --------------------------------------------------------------------------
def gat_attn_kernel(cols_ref, cnt_ref, snd_ref, shn_ref, xw_ref, adj_ref,
                    bias_ref, out_ref, m_sc, l_sc, acc_sc,
                    *, heads, fd, concat, has_multi):
    i = pl.program_id(0)
    j = pl.program_id(1)

    @pl.when(j == 0)
    def _init():
        m_sc[...] = jnp.full_like(m_sc, NEG_BIG)
        l_sc[...] = jnp.zeros_like(l_sc)
        acc_sc[...] = jnp.zeros_like(acc_sc)

    @pl.when(j < cnt_ref[i])                    # skip clamped tail iterations
    def _compute():
        adj = adj_ref[...]                      # [TM, TN] int8 edge counts
        if has_multi:
            # duplicate-edge softmax: exp(e + log c) == c * exp(e)
            mask_bias = jnp.where(adj > 0, jnp.log(adj.astype(jnp.float32)),
                                  jnp.float32(NEG_BIG))
        else:
            mask_bias = jnp.where(adj > 0, jnp.float32(0.0), jnp.float32(NEG_BIG))
        xw = xw_ref[...]                        # [TN, hfp] bf16 (packed heads)

        for h in range(heads):                  # static, unrolled (heads small)
            a_d = snd_ref[:, heads + h:heads + h + 1]            # [TM, 1]
            a_s = shn_ref[h:h + 1, :]                            # [1, TN]
            e = a_d + a_s
            e = jnp.where(e >= 0, e, 0.2 * e)                    # leaky_relu(0.2)
            e = e + mask_bias
            m_prev = m_sc[h]
            m_new = jnp.maximum(m_prev, jnp.max(e, axis=-1, keepdims=True))
            corr = jnp.exp(m_prev - m_new)
            p = jnp.exp(e - m_new)
            l_sc[h] = corr * l_sc[h] + jnp.sum(p, axis=-1, keepdims=True)
            acc_sc[h] = corr * acc_sc[h] + jnp.dot(
                p.astype(jnp.bfloat16), xw[:, h * fd:(h + 1) * fd],
                preferred_element_type=jnp.float32)
            m_sc[h] = m_new

    @pl.when(j == pl.num_programs(1) - 1)
    def _finalize():
        tm, ow = out_ref.shape
        if concat:
            parts = [acc_sc[h] * pl.reciprocal(l_sc[h], approx=True)
                     for h in range(heads)]
            used = heads * fd
        else:
            res = acc_sc[0] * pl.reciprocal(l_sc[0], approx=True)
            for h in range(1, heads):
                res = res + acc_sc[h] * pl.reciprocal(l_sc[h], approx=True)
            parts = [res * jnp.float32(1.0 / heads)]
            used = fd
        if ow > used:                           # zero padding lanes explicitly
            parts.append(jnp.zeros((tm, ow - used), jnp.float32))
        res_full = parts[0] if len(parts) == 1 else jnp.concatenate(parts, axis=-1)
        out_ref[...] = res_full + bias_ref[...]  # single lane-dense store


# --------------------------------------------------------------------------
# One GATConv layer (two pallas_calls)
# --------------------------------------------------------------------------
def gat_conv_layer(x_pad, layer, adj_i8, cols, cnt, nj, *, tile, vmem_limit,
                   has_multi):
    n_pad, fin_pad = x_pad.shape
    assert fin_pad == layer["fin_pad"]
    heads, fd, concat = layer["heads"], layer["fd"], layer["concat"]
    hfp, sp = layer["hfp"], layer["sp"]
    shn_rows, out_w = layer["shn_rows"], layer["out_w"]
    ni = n_pad // tile

    proj = functools.partial(gat_proj_kernel, hfp=hfp, shn_rows=shn_rows)
    xw, snd, shn = pl.pallas_call(
        proj,
        out_shape=(
            jax.ShapeDtypeStruct((n_pad, hfp), jnp.bfloat16),
            jax.ShapeDtypeStruct((n_pad, sp), jnp.float32),
            jax.ShapeDtypeStruct((shn_rows, n_pad), jnp.float32),
        ),
        grid=(ni,),
        in_specs=[
            pl.BlockSpec((tile, fin_pad), lambda i: (i, 0)),
            pl.BlockSpec(layer["rhs"].shape, lambda i: (0, 0)),
        ],
        out_specs=(
            pl.BlockSpec((tile, hfp), lambda i: (i, 0)),
            pl.BlockSpec((tile, sp), lambda i: (i, 0)),
            pl.BlockSpec((shn_rows, tile), lambda i: (0, i)),
        ),
        compiler_params=pltpu.CompilerParams(
            dimension_semantics=("parallel",),
            vmem_limit_bytes=vmem_limit),
    )(x_pad, layer["rhs"])

    # deeper buffering on the dominant streams only when the compacted source
    # loop is long enough to fill the extra buffers (v5e latency hiding).
    depth = 3 if nj >= 3 else 0

    def _spec(shape, index_map, buffered):
        if buffered and depth:
            return pl.BlockSpec(shape, index_map, pipeline_mode=pl.Buffered(depth))
        return pl.BlockSpec(shape, index_map)

    attn = functools.partial(gat_attn_kernel, heads=heads, fd=fd, concat=concat,
                             has_multi=has_multi)
    grid_spec = pltpu.PrefetchScalarGridSpec(
        num_scalar_prefetch=2,                 # cols (flattened), cnt
        grid=(ni, nj),
        in_specs=[
            pl.BlockSpec((tile, sp), lambda i, j, c, k: (i, 0)),          # dst terms
            pl.BlockSpec((shn_rows, tile),
                         lambda i, j, c, k: (0, c[i * nj + j])),          # src terms
            _spec((tile, hfp),
                  lambda i, j, c, k: (c[i * nj + j], 0), buffered=True),  # xW (src)
            _spec((tile, tile),
                  lambda i, j, c, k: (i, c[i * nj + j]), buffered=True),  # adj counts
            pl.BlockSpec((1, out_w), lambda i, j, c, k: (0, 0)),          # bias
        ],
        out_specs=pl.BlockSpec((tile, out_w), lambda i, j, c, k: (i, 0)),
        scratch_shapes=[
            pltpu.VMEM((heads, tile, 1), jnp.float32),    # running max
            pltpu.VMEM((heads, tile, 1), jnp.float32),    # running sum
            pltpu.VMEM((heads, tile, fd), jnp.float32),   # running weighted acc
        ],
    )
    out = pl.pallas_call(
        attn,
        out_shape=jax.ShapeDtypeStruct((n_pad, out_w), jnp.float32),
        grid_spec=grid_spec,
        compiler_params=pltpu.CompilerParams(
            dimension_semantics=("parallel", "arbitrary"),
            vmem_limit_bytes=vmem_limit),
    )(cols, cnt, snd, shn, xw, adj_i8, layer["bias_pad"])
    return out


# --------------------------------------------------------------------------
# Parameter construction (unpadded, PyG-style) + packing into padded layout
# --------------------------------------------------------------------------
def _glorot(key, shape):
    fan = shape[0] + shape[-1]
    return (jax.random.uniform(key, shape, jnp.float32, -1.0, 1.0)
            * jnp.sqrt(6.0 / fan))


def make_layer_params(key, f_in, f_out, heads, concat):
    k1, k2, k3 = jax.random.split(key, 3)
    return dict(
        w=_glorot(k1, (f_in, heads * f_out)),
        att_src=_glorot(k2, (heads, f_out)),
        att_dst=_glorot(k3, (heads, f_out)),
        bias=jnp.zeros((heads * f_out if concat else f_out,), jnp.float32),
        f_in=f_in, f_out=f_out, heads=heads, concat=concat)


def build_gat_params(key, in_channels, hidden_channels, out_channels, heads, num_lay):
    keys = jax.random.split(key, num_lay)
    layers = [make_layer_params(keys[0], in_channels, hidden_channels, heads, True)]
    for i in range(num_lay - 2):
        layers.append(make_layer_params(keys[1 + i], hidden_channels * heads,
                                        hidden_channels * heads, 1, True))
    layers.append(make_layer_params(keys[-1], hidden_channels * heads,
                                    out_channels, 1, False))
    return layers


def pack_layers(layers):
    """Densely pack per-head features (stride f_out) and fuse W with the
    per-head attention vectors into a single bf16 RHS [W | W@A]."""
    packed = []
    for p in layers:
        heads, f_out, f_in, concat = p["heads"], p["f_out"], p["f_in"], p["concat"]
        fd = f_out                                    # dense per-head stride
        hfp = _round_up(heads * fd, LANE)
        sp = _round_up(2 * heads, LANE)
        shn_rows = _round_up(heads, 8)
        fin_pad = _round_up(f_in, LANE)

        w_pad = jnp.zeros((fin_pad, hfp), jnp.float32)
        w_pad = w_pad.at[:f_in, :heads * f_out].set(p["w"])
        att_mat = jnp.zeros((hfp, sp), jnp.float32)   # col h -> a_src[h], heads+h -> a_dst[h]
        for h in range(heads):
            att_mat = att_mat.at[h * fd:h * fd + f_out, h].set(p["att_src"][h])
            att_mat = att_mat.at[h * fd:h * fd + f_out, heads + h].set(p["att_dst"][h])
        rhs = jnp.concatenate([w_pad, w_pad @ att_mat], axis=1).astype(jnp.bfloat16)

        out_w = hfp if concat else _round_up(f_out, LANE)
        nb = heads * f_out if concat else f_out
        bias_pad = jnp.zeros((1, out_w), jnp.float32).at[0, :nb].set(p["bias"])

        packed.append(dict(rhs=rhs, bias_pad=bias_pad, heads=heads, fd=fd,
                           f_out=f_out, concat=concat, hfp=hfp, sp=sp,
                           shn_rows=shn_rows, fin_pad=fin_pad, out_w=out_w))
    return packed


# --------------------------------------------------------------------------
# Graph densification, block-sparse tile schedule, forward pass
# --------------------------------------------------------------------------
def edge_index_to_adj_counts(edge_index, num_nodes, n_pad):
    # counts[dst, src] = multiplicity of edge src->dst; self loops deduped to 1
    # (PyG GATConv: remove_self_loops + add_self_loops). Padded rows also get a
    # self loop so their (discarded) softmax rows stay finite.
    src, dst = edge_index[0], edge_index[1]
    adj = jnp.zeros((n_pad, n_pad), jnp.int32).at[dst, src].add(1)
    eye = jnp.eye(n_pad, dtype=jnp.int32)
    adj = adj * (1 - eye) + eye
    return jnp.minimum(adj, 127).astype(jnp.int8)


def build_tile_schedule(adj_i8, tile):
    """Per dst row-block list of nonzero src tile-columns (compacted j grid)."""
    a = np.asarray(adj_i8)                       # adjacency is concrete (eager)
    nb = a.shape[0] // tile
    nz = a.reshape(nb, tile, nb, tile).astype(bool).any(axis=(1, 3))
    cnt = nz.sum(axis=1).astype(np.int32)        # >= 1 (diagonal self-loop tile)
    nj = int(cnt.max())
    cols = np.zeros((nb, nj), np.int32)
    for i in range(nb):
        idx = np.flatnonzero(nz[i]).astype(np.int32)
        cols[i, :idx.size] = idx
        cols[i, idx.size:] = idx[-1]             # clamp: repeat last valid tile
    return jnp.asarray(cols.reshape(-1)), jnp.asarray(cnt), nj


def gat_forward(packed_layers, x, edge_index, out_channels):
    n = x.shape[0]
    tile_cap, vmem_limit = _hw_budget()
    tile, n_pad = _choose_tiling(n, tile_cap)

    fin_pad = packed_layers[0]["fin_pad"]
    x_pad = jnp.zeros((n_pad, fin_pad), jnp.float32).at[:n, :x.shape[1]].set(x)
    adj_i8 = edge_index_to_adj_counts(edge_index, n, n_pad)
    cols, cnt, nj = build_tile_schedule(adj_i8, tile)
    has_multi = bool(jnp.max(adj_i8) > 1)        # static: skip log for 0/1 graphs

    h = x_pad
    for layer in packed_layers:
        h = gat_conv_layer(h, layer, adj_i8, cols, cnt, nj, tile=tile,
                           vmem_limit=vmem_limit, has_multi=has_multi)
    out = h[:n, :out_channels]
    embed = out                                  # copy.copy(x) after last layer
    return out, embed


# --------------------------------------------------------------------------
# Pure-JAX f32 reference (loose correctness check; kernels use bf16 MXU math)
# --------------------------------------------------------------------------
def gat_reference(layers, x, adj_counts):
    h = x
    for p in layers:
        heads, f_out, concat = p["heads"], p["f_out"], p["concat"]
        xw = h @ p["w"]
        outs = []
        for hh in range(heads):
            xw_h = xw[:, hh * f_out:(hh + 1) * f_out]
            a_s = xw_h @ p["att_src"][hh]
            a_d = xw_h @ p["att_dst"][hh]
            e = a_d[:, None] + a_s[None, :]
            e = jnp.where(e >= 0, e, 0.2 * e)
            e = jnp.where(adj_counts > 0, e, -jnp.inf)
            p_un = jnp.exp(e - jnp.max(e, axis=-1, keepdims=True)) * adj_counts
            alpha = p_un / jnp.sum(p_un, axis=-1, keepdims=True)
            outs.append(alpha @ xw_h)
        out = jnp.concatenate(outs, axis=-1) if concat else sum(outs) / heads
        h = out + p["bias"][None, :]
    return h


# --------------------------------------------------------------------------
if __name__ == "__main__":
    key = jax.random.PRNGKey(0)
    k_x, k_s, k_d, k_p = jax.random.split(key, 4)

    # small synthetic graph (pads 400 -> 512 nodes, 2x2 tile grid).  Edges only
    # land on the first 200 destination nodes so one whole adjacency tile is
    # empty: exercises the compacted / skipped source-tile path, the clamped
    # tail iteration, duplicate-edge counts, and the multi-tile online softmax.
    num_nodes = 400
    in_channels = 32
    hidden_channels = 16
    out_channels = 16
    heads = 2
    num_lay = 3
    num_edges = 4096

    x = jax.random.normal(k_x, (num_nodes, in_channels), jnp.float32)
    src = jax.random.randint(k_s, (num_edges,), 0, num_nodes, dtype=jnp.int32)
    dst = jax.random.randint(k_d, (num_edges,), 0, 200, dtype=jnp.int32)
    edge_index = jnp.stack([src, dst])

    layers = build_gat_params(k_p, in_channels, hidden_channels,
                              out_channels, heads, num_lay)
    packed = pack_layers(layers)

    out, embed = gat_forward(packed, x, edge_index, out_channels)
    jax.block_until_ready((out, embed))

    assert out.shape == (num_nodes, out_channels)
    assert embed.shape == (num_nodes, out_channels)

    # loose-tolerance check vs f32 reference (kernels use bf16 MXU math)
    adj_counts = edge_index_to_adj_counts(
        edge_index, num_nodes, num_nodes).astype(jnp.float32)
    ref = gat_reference(layers, x, adj_counts)
    err = float(jnp.max(jnp.abs(out - ref)))
    assert err < 0.3, f"kernel vs f32 reference max abs err = {err}"
    print("KERNEL_OK")
</pallas_src>

<mosaic_0001>
module attributes {stable_mosaic.version = 11 : i64} {
  func.func @gat_proj_kernel(%arg0: i32, %arg1: memref<256x128xf32, #tpu.memory_space<vmem>>, %arg2: memref<128x256xbf16, #tpu.memory_space<vmem>>, %arg3: memref<256x128xbf16, #tpu.memory_space<vmem>>, %arg4: memref<256x128xf32, #tpu.memory_space<vmem>>, %arg5: memref<8x256xf32, #tpu.memory_space<vmem>>) attributes {dimension_semantics = [#tpu.dimension_semantics<parallel>], iteration_bounds = array<i64: 2>, scalar_prefetch = 0 : i64, scratch_operands = 0 : i64, tpu.core_type = #tpu.core_type<tc>, window_params = [{transform_indices = @transform_0, window_bounds = array<i64: 256, 128>}, {pipeline_mode = #tpu.pipeline_mode<synchronous>, transform_indices = @transform_1, window_bounds = array<i64: 128, 256>}, {transform_indices = @transform_2, window_bounds = array<i64: 256, 128>}, {transform_indices = @transform_3, window_bounds = array<i64: 256, 128>}, {transform_indices = @transform_4, window_bounds = array<i64: 8, 256>}]} {
    %c0 = arith.constant 0 : index
    %c0_0 = arith.constant 0 : index
    %0 = vector.load %arg1[%c0, %c0_0] : memref<256x128xf32, #tpu.memory_space<vmem>>, vector<256x128xf32>
    %1 = arith.truncf %0 : vector<256x128xf32> to vector<256x128xbf16>
    %c0_1 = arith.constant 0 : index
    %c0_2 = arith.constant 0 : index
    %2 = vector.load %arg2[%c0_1, %c0_2] : memref<128x256xbf16, #tpu.memory_space<vmem>>, vector<128x256xbf16>
    %cst = arith.constant dense<0.000000e+00> : vector<256x256xf32>
    %3 = tpu.matmul %1, %2, %cst {dimension_numbers = #tpu.dot_dimension_numbers<[1], [0], [0], [1], [0, 0, 1, 1], [], []>} : vector<256x128xbf16>, vector<128x256xbf16>, vector<256x256xf32> -> vector<256x256xf32>
    %4 = vector.extract_strided_slice %3 {offsets = [0, 0], sizes = [256, 128], strides = [1, 1]} : vector<256x256xf32> to vector<256x128xf32>
    %5 = arith.truncf %4 : vector<256x128xf32> to vector<256x128xbf16>
    %c0_3 = arith.constant 0 : index
    %c0_4 = arith.constant 0 : index
    %6 = vector.load %arg3[%c0_3, %c0_4] : memref<256x128xbf16, #tpu.memory_space<vmem>>, vector<256x128xbf16>
    tpu.vector_store %arg3[%c0_3, %c0_4], %5 {strides = array<i32>} : memref<256x128xbf16, #tpu.memory_space<vmem>>, vector<256x128xbf16>,
    %7 = vector.extract_strided_slice %3 {offsets = [0, 128], sizes = [256, 128], strides = [1, 1]} : vector<256x256xf32> to vector<256x128xf32>
    %c0_5 = arith.constant 0 : index
    %c0_6 = arith.constant 0 : index
    %8 = vector.load %arg4[%c0_5, %c0_6] : memref<256x128xf32, #tpu.memory_space<vmem>>, vector<256x128xf32>
    tpu.vector_store %arg4[%c0_5, %c0_6], %7 {strides = array<i32>} : memref<256x128xf32, #tpu.memory_space<vmem>>, vector<256x128xf32>,
    %9 = vector.extract_strided_slice %7 {offsets = [0, 0], sizes = [256, 8], strides = [1, 1]} : vector<256x128xf32> to vector<256x8xf32>
    %10 = tpu.transpose %9, [1, 0] : vector<256x8xf32> -> vector<8x256xf32>
    %c0_7 = arith.constant 0 : index
    %c0_8 = arith.constant 0 : index
    %11 = vector.load %arg5[%c0_7, %c0_8] : memref<8x256xf32, #tpu.memory_space<vmem>>, vector<8x256xf32>
    tpu.vector_store %arg5[%c0_7, %c0_8], %10 {strides = array<i32>} : memref<8x256xf32, #tpu.memory_space<vmem>>, vector<8x256xf32>,
    return
  }
  func.func @transform_0(%arg0: i32) -> (i32, i32) {
    %c0_i32 = arith.constant 0 : i32
    %c0_i32_0 = arith.constant 0 : i32
    return %arg0, %c0_i32 : i32, i32
  }
  func.func @transform_1(%arg0: i32) -> (i32, i32) {
    %c0_i32 = arith.constant 0 : i32
    %c0_i32_0 = arith.constant 0 : i32
    %c0_i32_1 = arith.constant 0 : i32
    return %c0_i32, %c0_i32_0 : i32, i32
  }
  func.func @transform_2(%arg0: i32) -> (i32, i32) {
    %c0_i32 = arith.constant 0 : i32
    %c0_i32_0 = arith.constant 0 : i32
    return %arg0, %c0_i32 : i32, i32
  }
  func.func @transform_3(%arg0: i32) -> (i32, i32) {
    %c0_i32 = arith.constant 0 : i32
    %c0_i32_0 = arith.constant 0 : i32
    return %arg0, %c0_i32 : i32, i32
  }
  func.func @transform_4(%arg0: i32) -> (i32, i32) {
    %c0_i32 = arith.constant 0 : i32
    %c0_i32_0 = arith.constant 0 : i32
    return %c0_i32, %arg0 : i32, i32
  }
}

</mosaic_0001>

<llo_original>
// kernel: tpu_custom_call.1
$region0: #{tpu_custom_call.1}
  #allocation0 [shape = 'u32[]', space=smem, size = 0x4, offset = 0x4, fixed_abs, tag = 'smem constant byte address 0x4 - core index']
  #allocation1 [shape = 'u32[144,128]{1,0:T(1,128)}', space=vmem, size = 0x12000, scoped, tag = 'internal scratch']
  %s0 = inlined_call_operand.hbm [shape: f32[512,128], index: 0, kind: input, shape index: {}]
  %s1 = inlined_call_operand.hbm [shape: bf16[128,256], index: 1, kind: input, shape index: {}]
  %s2 = inlined_call_operand.hbm [shape: bf16[512,128], index: 2, kind: output, shape index: {0}]
  %s3 = inlined_call_operand.hbm [shape: f32[512,128], index: 3, kind: output, shape index: {1}]
  %s4 = inlined_call_operand.hbm [shape: f32[8,512], index: 4, kind: output, shape index: {2}]
  %5 = xla_tuple %s2, %s3, %s4
  %s6 = sld [smem:[#allocation0]]
  $region65: #{tpu_custom_call.1} parent=0
    _
  %s8 = ssub.s32 1, %s6
  %s9 = scalar_select 0, %s8, %s6
  $region1: #{tpu_custom_call.1} parent=0
    #allocation2 [shape = 'u8[262144]{0}', space=vmem, size = 0x40000, scoped, tag = 'input window, operand 0']
    #allocation3 [shape = 's32[2]{0}', space=sflag, size = 0x8, scoped, tag = 'scoped memory for tpu_custom_call.1']
    #allocation4 [shape = 's32[2]{0}', space=sflag, size = 0x8, scoped, tag = 'scoped memory for tpu_custom_call.1']
    #allocation5 [shape = 'u8[65536]{0}', space=vmem, size = 0x10000, scoped, tag = 'input window, operand 1, single buffered']
    #allocation6 [shape = 's32[1]{0}', space=sflag, size = 0x4, scoped, tag = 'scoped memory for tpu_custom_call.1']
    #allocation7 [shape = 'u8[131072]{0}', space=vmem, size = 0x20000, scoped, tag = 'output window, operand 0']
    #allocation8 [shape = 'u8[262144]{0}', space=vmem, size = 0x40000, scoped, tag = 'output window, operand 1']
    #allocation9 [shape = 's32[2]{0}', space=sflag, size = 0x8, scoped, tag = 'scoped memory for tpu_custom_call.1']
    #allocation10 [shape = 'u8[16384]{0}', space=vmem, size = 0x4000, scoped, tag = 'output window, operand 2']
    %10 = vsyncpa [#allocation3], 0
    %s11 = scalar_lea.sflag [#allocation3], 1
    %12 = vsyncpa %s11, 0
    %13 = vsyncpa [#allocation6], 0
    %14 = vsyncpa [#allocation4], 0
    %s15 = scalar_lea.sflag [#allocation4], 1
    %16 = vsyncpa %s15, 0
    %17 = vsyncpa [#allocation9], 0
    %s18 = scalar_lea.sflag [#allocation9], 1
    %19 = vsyncpa %s18, 0
    loop: start=0, step=1, limit=4
    $region2: #{tpu_custom_call.1} parent=1 // loop_pre_header
      _
    $region3: #{tpu_custom_call.1} parent=1 // loop_header
      %s21 = sphi 0, %s25
      %p22 = scmp.ge.s32.totalorder %s21, 4
      %s31 = sphi 0, %s33
      %s34 = sphi 0, %s31
      %s35 = sphi 0, %s34
      %s51 = sphi 0, %s35
      %s55 = sphi 0, %s55
      %s57 = sphi 0, %s55
      %s58 = sphi 0, %s57
      %s72 = sphi 0, %s58
      %s78 = sphi 0, %s80
      %s81 = sphi 0, %s78
      %s82 = sphi 0, %s81
      %s98 = sphi 0, %s82
      %s104 = sphi 0, %s106
      %s107 = sphi 0, %s104
      %s108 = sphi 0, %s107
      %s124 = sphi 0, %s108
      %s130 = sphi 0, %s132
      %s133 = sphi 0, %s130
      %s134 = sphi 0, %s133
      %s150 = sphi 0, %s134
    $region4: #{tpu_custom_call.1} parent=1 // loop_header_branch
      %24 = sbr.rel (%p22) target = $region8
    $region5: #{tpu_custom_call.1} parent=1 // loop_body
      %s26 = ssub.s32 %s21, 1
      %s27 = ssub.s32 %s21, 2
      %s28 = sadd.s32 %s21, 1
      %s29 = ssub.s32 %s21, %s28
      %p30 = scmp.eq.s32.totalorder %s29, 0
      %s32 = sadd.s32 %s31, 1
      %s33 = scalar_select %p30, %s31, %s32
      %p36 = pneg %p30
      %p37 = scmp.eq.s32.totalorder %s21, 1
      %p38 = por %p36, %p37
      %p39 = scmp.ne.s32.totalorder %s31, %s34
      %p40 = scmp.eq.s32.totalorder %s21, 0
      %p41 = por %p39, %p40
      %p42 = scmp.ne.s32.totalorder %s31, %s34
      %p43 = scmp.eq.s32.totalorder %s26, 1
      %p44 = por %p42, %p43
      %p45 = scmp.ne.s32.totalorder %s34, %s35
      %p46 = scmp.eq.s32.totalorder %s26, 0
      %p47 = por %p45, %p46
      %p48 = scmp.ne.s32.totalorder %s34, %s35
      %p49 = scmp.eq.s32.totalorder %s27, 1
      %p50 = por %p48, %p49
      %p52 = scmp.ne.s32.totalorder %s35, %s51
      %p53 = scmp.eq.s32.totalorder %s27, 0
      %p54 = por %p52, %p53
      %s56 = sadd.s32 %s55, 1
      %p59 = scmp.eq.s32.totalorder %s21, 1
      %p60 = scmp.ne.s32.totalorder %s55, %s57
      %p61 = scmp.eq.s32.totalorder %s21, 0
      %p62 = por %p60, %p61
      %p63 = scmp.ne.s32.totalorder %s55, %s57
      %p64 = scmp.eq.s32.totalorder %s26, 1
      %p65 = por %p63, %p64
      %p66 = scmp.ne.s32.totalorder %s57, %s58
      %p67 = scmp.eq.s32.totalorder %s26, 0
      %p68 = por %p66, %p67
      %p69 = scmp.ne.s32.totalorder %s57, %s58
      %p70 = scmp.eq.s32.totalorder %s27, 1
      %p71 = por %p69, %p70
      %p73 = scmp.ne.s32.totalorder %s58, %s72
      %p74 = scmp.eq.s32.totalorder %s27, 0
      %p75 = por %p73, %p74
      %s76 = ssub.s32 %s21, %s28
      %p77 = scmp.eq.s32.totalorder %s76, 0
      %s79 = sadd.s32 %s78, 1
      %s80 = scalar_select %p77, %s78, %s79
      %p83 = pneg %p77
      %p84 = scmp.eq.s32.totalorder %s21, 1
      %p85 = por %p83, %p84
      %p86 = scmp.ne.s32.totalorder %s78, %s81
      %p87 = scmp.eq.s32.totalorder %s21, 0
      %p88 = por %p86, %p87
      %p89 = scmp.ne.s32.totalorder %s78, %s81
      %p90 = scmp.eq.s32.totalorder %s26, 1
      %p91 = por %p89, %p90
      %p92 = scmp.ne.s32.totalorder %s81, %s82
      %p93 = scmp.eq.s32.totalorder %s26, 0
      %p94 = por %p92, %p93
      %p95 = scmp.ne.s32.totalorder %s81, %s82
      %p96 = scmp.eq.s32.totalorder %s27, 1
      %p97 = por %p95, %p96
      %p99 = scmp.ne.s32.totalorder %s82, %s98
      %p100 = scmp.eq.s32.totalorder %s27, 0
      %p101 = por %p99, %p100
      %s102 = ssub.s32 %s21, %s28
      %p103 = scmp.eq.s32.totalorder %s102, 0
      %s105 = sadd.s32 %s104, 1
      %s106 = scalar_select %p103, %s104, %s105
      %p109 = pneg %p103
      %p110 = scmp.eq.s32.totalorder %s21, 1
      %p111 = por %p109, %p110
      %p112 = scmp.ne.s32.totalorder %s104, %s107
      %p113 = scmp.eq.s32.totalorder %s21, 0
      %p114 = por %p112, %p113
      %p115 = scmp.ne.s32.totalorder %s104, %s107
      %p116 = scmp.eq.s32.totalorder %s26, 1
      %p117 = por %p115, %p116
      %p118 = scmp.ne.s32.totalorder %s107, %s108
      %p119 = scmp.eq.s32.totalorder %s26, 0
      %p120 = por %p118, %p119
      %p121 = scmp.ne.s32.totalorder %s107, %s108
      %p122 = scmp.eq.s32.totalorder %s27, 1
      %p123 = por %p121, %p122
      %p125 = scmp.ne.s32.totalorder %s108, %s124
      %p126 = scmp.eq.s32.totalorder %s27, 0
      %p127 = por %p125, %p126
      %s128 = ssub.s32 %s21, %s28
      %p129 = scmp.eq.s32.totalorder %s128, 0
      %s131 = sadd.s32 %s130, 1
      %s132 = scalar_select %p129, %s130, %s131
      %p135 = pneg %p129
      %p136 = scmp.eq.s32.totalorder %s21, 1
      %p137 = por %p135, %p136
      %p138 = scmp.ne.s32.totalorder %s130, %s133
      %p139 = scmp.eq.s32.totalorder %s21, 0
      %p140 = por %p138, %p139
      %p141 = scmp.ne.s32.totalorder %s130, %s133
      %p142 = scmp.eq.s32.totalorder %s26, 1
      %p143 = por %p141, %p142
      %p144 = scmp.ne.s32.totalorder %s133, %s134
      %p145 = scmp.eq.s32.totalorder %s26, 0
      %p146 = por %p144, %p145
      %p147 = scmp.ne.s32.totalorder %s133, %s134
      %p148 = scmp.eq.s32.totalorder %s27, 1
      %p149 = por %p147, %p148
      %p151 = scmp.ne.s32.totalorder %s134, %s150
      %p152 = scmp.eq.s32.totalorder %s27, 0
      %p153 = por %p151, %p152
      %p154 = scmp.le.s32.totalorder 1, %s21
      %p155 = scmp.lt.s32.totalorder %s21, 3
      %p156 = pnand %p154, %p155
      %p157 = pneg %p156
      // Predicated region
      $region9: #{tpu_custom_call.1} parent=5 // pred_check
        _
      $region10: #{tpu_custom_call.1} parent=5 // pred_check_branch
        %159 = sbr.rel (%p156) target = $region12
      $region11: #{tpu_custom_call.1} parent=5 // pred_region
        %s160 = ssub.s32 %s21, 1
        // Predicated region
        $region13: #{tpu_custom_call.1} parent=11 // pred_check
          %p161 = pneg %p68
        $region14: #{tpu_custom_call.1} parent=11 // pred_check_branch
          %163 = sbr.rel (%p161) target = $region16
        $region15: #{tpu_custom_call.1} parent=11 // pred_region
          %s165 = ssub.s32 2048, 2048
          %166 = vsyncadd [#allocation6], %s165
          %s167 = sshll.u32 [#allocation5], 4
          %s168 = int_to_ptr.vmem [resolvable:$true] %s167
          %173 = dma.hbm_to_vmem [thread:$0]  %s1, 2048, %s168, [#allocation6], 128, 128, 8
        $region16: #{tpu_custom_call.1} parent=11 // pred_fallthru
          _
      $region12: #{tpu_custom_call.1} parent=5 // pred_fallthru
        _
      %p174 = scmp.lt.s32.totalorder %s21, 2
      // Predicated region
      $region17: #{tpu_custom_call.1} parent=5 // pred_check
        %p175 = pneg %p174
      $region18: #{tpu_custom_call.1} parent=5 // pred_check_branch
        %177 = sbr.rel (%p175) target = $region20
      $region19: #{tpu_custom_call.1} parent=5 // pred_region
        // Predicated region
        $region21: #{tpu_custom_call.1} parent=19 // pred_check
          %p178 = pneg %p41
        $region22: #{tpu_custom_call.1} parent=19 // pred_check_branch
          %180 = sbr.rel (%p178) target = $region24
        $region23: #{tpu_custom_call.1} parent=19 // pred_region
          %s181 = sand.u32 %s31, 1
          %s182 = scalar_lea.sflag [#allocation3], %s181
          %s183 = sand.u32 %s31, 1
          %s184 = smul.addr %s183, 256
          %s185 = scalar_lea.vmem [#allocation2], %s184
          %s186 = smul.u32 32, %s21
          %s188 = ssub.s32 4096, 4096
          %189 = vsyncadd %s182, %s188
          %s190 = smul.addr %s186, 128
          %s191 = scalar_lea.hbm %s0, %s190
          %s192 = sshll.u32 %s185, 4
          %s193 = int_to_ptr.vmem [resolvable:$true] %s192
          %198 = dma.hbm_to_vmem [thread:$0]  %s191, 4096, %s193, %s182, 128, 128, 8
        $region24: #{tpu_custom_call.1} parent=19 // pred_fallthru
          _
      $region20: #{tpu_custom_call.1} parent=5 // pred_fallthru
        _
      %p199 = scmp.le.s32.totalorder 1, %s21
      %p200 = scmp.lt.s32.totalorder %s21, 3
      %p201 = pnand %p199, %p200
      %p202 = pneg %p201
      // Predicated region
      $region25: #{tpu_custom_call.1} parent=5 // pred_check
        _
      $region26: #{tpu_custom_call.1} parent=5 // pred_check_branch
        %204 = sbr.rel (%p201) target = $region28
      $region27: #{tpu_custom_call.1} parent=5 // pred_region
        %s205 = ssub.s32 %s21, 1
        %s206 = sand.u32 %s34, 1
        %s207 = scalar_lea.sflag [#allocation3], %s206
        %s208 = sand.u32 %s34, 1
        %s209 = smul.addr %s208, 256
        %s210 = scalar_lea.vmem [#allocation2], %s209
        // Predicated region
        $region29: #{tpu_custom_call.1} parent=27 // pred_check
          %p211 = pneg %p47
        $region30: #{tpu_custom_call.1} parent=27 // pred_check_branch
          %213 = sbr.rel (%p211) target = $region32
        $region31: #{tpu_custom_call.1} parent=27 // pred_region
          %214 = dma.done %s207, 4096
        $region32: #{tpu_custom_call.1} parent=27 // pred_fallthru
          _
        // Predicated region
        $region33: #{tpu_custom_call.1} parent=27 // pred_check
          %p215 = pneg %p68
        $region34: #{tpu_custom_call.1} parent=27 // pred_check_branch
          %217 = sbr.rel (%p215) target = $region36
        $region35: #{tpu_custom_call.1} parent=27 // pred_region
          %218 = dma.done [#allocation6], 2048
        $region36: #{tpu_custom_call.1} parent=27 // pred_fallthru
          _
        %s219 = sand.u32 %s34, 1
        %s220 = scalar_lea.sflag [#allocation3], %s219
        %s221 = sand.u32 %s34, 1
        %s222 = smul.addr %s221, 256
        %s223 = scalar_lea.vmem [#allocation2], %s222
        %p224 = pneg %p47
        %p225 = pneg %p44
        %p226 = pneg %p68
        %p227 = pneg %p65
        %p228 = pneg %p94
        %p229 = pneg %p91
        %s230 = sand.u32 %s81, 1
        %s231 = scalar_lea.sflag [#allocation4], %s230
        %s232 = sand.u32 %s81, 1
        %s233 = smul.addr %s232, 128
        %s234 = scalar_lea.vmem [#allocation7], %s233
        %p235 = pneg %p120
        %p236 = pneg %p117
        %s237 = sand.u32 %s26, 1
        %s238 = scalar_lea.sflag [#allocation9], %s237
        %s239 = sand.u32 %s107, 1
        %s240 = smul.addr %s239, 256
        %s241 = scalar_lea.vmem [#allocation8], %s240
        %p242 = pneg %p146
        %p243 = pneg %p143
        %s244 = sand.u32 %s26, 1
        %s245 = scalar_lea.sflag [#allocation9], %s244
        %s246 = sand.u32 %s133, 1
        %s247 = smul.addr %s246, 16
        %s248 = scalar_lea.vmem [#allocation10], %s247
        %s249 = smul.u32 32, %s26
        %s250 = smul.u32 32, %s26
        %s251 = smul.u32 32, %s26
        %s252 = smul.u32 2, %s26
        %v254 = vld [vmem:[%s210] sm:$0xff]
        %v255 = vld [vmem:[%s210 + $0x8] sm:$0xff]
        %v256 = vld [vmem:[%s210 + $0x10] sm:$0xff]
        %v257 = vld [vmem:[%s210 + $0x18] sm:$0xff]
        %v258 = vld [vmem:[%s210 + $0x20] sm:$0xff]
        %v259 = vld [vmem:[%s210 + $0x28] sm:$0xff]
        %v260 = vld [vmem:[%s210 + $0x30] sm:$0xff]
        %v261 = vld [vmem:[%s210 + $0x38] sm:$0xff]
        %v262 = vld [vmem:[%s210 + $0x40] sm:$0xff]
        %v263 = vld [vmem:[%s210 + $0x48] sm:$0xff]
        %v264 = vld [vmem:[%s210 + $0x50] sm:$0xff]
        %v265 = vld [vmem:[%s210 + $0x58] sm:$0xff]
        %v266 = vld [vmem:[%s210 + $0x60] sm:$0xff]
        %v267 = vld [vmem:[%s210 + $0x68] sm:$0xff]
        %v268 = vld [vmem:[%s210 + $0x70] sm:$0xff]
        %v269 = vld [vmem:[%s210 + $0x78] sm:$0xff]
        %v270 = vld [vmem:[%s210 + $0x80] sm:$0xff]
        %v271 = vld [vmem:[%s210 + $0x88] sm:$0xff]
        %v272 = vld [vmem:[%s210 + $0x90] sm:$0xff]
        %v273 = vld [vmem:[%s210 + $0x98] sm:$0xff]
        %v274 = vld [vmem:[%s210 + $0xa0] sm:$0xff]
        %v275 = vld [vmem:[%s210 + $0xa8] sm:$0xff]
        %v276 = vld [vmem:[%s210 + $0xb0] sm:$0xff]
        %v277 = vld [vmem:[%s210 + $0xb8] sm:$0xff]
        %v278 = vld [vmem:[%s210 + $0xc0] sm:$0xff]
        %v279 = vld [vmem:[%s210 + $0xc8] sm:$0xff]
        %v280 = vld [vmem:[%s210 + $0xd0] sm:$0xff]
        %v281 = vld [vmem:[%s210 + $0xd8] sm:$0xff]
        %v282 = vld [vmem:[%s210 + $0xe0] sm:$0xff]
        %v283 = vld [vmem:[%s210 + $0xe8] sm:$0xff]
        %v284 = vld [vmem:[%s210 + $0xf0] sm:$0xff]
        %v285 = vld [vmem:[%s210 + $0xf8] sm:$0xff]
        %v286 = vpack.c.bf16 %v255, %v254
        %v287 = vpack.c.bf16 %v257, %v256
        %v288 = vpack.c.bf16 %v259, %v258
        %v289 = vpack.c.bf16 %v261, %v260
        %v290 = vpack.c.bf16 %v263, %v262
        %v291 = vpack.c.bf16 %v265, %v264
        %v292 = vpack.c.bf16 %v267, %v266
        %v293 = vpack.c.bf16 %v269, %v268
        %v294 = vpack.c.bf16 %v271, %v270
        %v295 = vpack.c.bf16 %v273, %v272
        %v296 = vpack.c.bf16 %v275, %v274
        %v297 = vpack.c.bf16 %v277, %v276
        %v298 = vpack.c.bf16 %v279, %v278
        %v299 = vpack.c.bf16 %v281, %v280
        %v300 = vpack.c.bf16 %v283, %v282
        %v301 = vpack.c.bf16 %v285, %v284
        %v302 = vld [vmem:[#allocation5] sm:$0xff]
        %v303 = vld [vmem:[#allocation5 + $0x8] sm:$0xff]
        %v304 = vld [vmem:[#allocation5 + $0x10] sm:$0xff]
        %v305 = vld [vmem:[#allocation5 + $0x18] sm:$0xff]
        %v306 = vld [vmem:[#allocation5 + $0x20] sm:$0xff]
        %v307 = vld [vmem:[#allocation5 + $0x28] sm:$0xff]
        %v308 = vld [vmem:[#allocation5 + $0x30] sm:$0xff]
        %v309 = vld [vmem:[#allocation5 + $0x38] sm:$0xff]
        %v310 = vld [vmem:[#allocation5 + $0x40] sm:$0xff]
        %v311 = vld [vmem:[#allocation5 + $0x48] sm:$0xff]
        %v312 = vld [vmem:[#allocation5 + $0x50] sm:$0xff]
        %v313 = vld [vmem:[#allocation5 + $0x58] sm:$0xff]
        %v314 = vld [vmem:[#allocation5 + $0x60] sm:$0xff]
        %v315 = vld [vmem:[#allocation5 + $0x68] sm:$0xff]
        %v316 = vld [vmem:[#allocation5 + $0x70] sm:$0xff]
        %v317 = vld [vmem:[#allocation5 + $0x78] sm:$0xff]
        %v334 = vunpack.c.l.b16 %v302
        %v335 = vunpack.c.h.b16 %v302
        %v336 = vunpack.c.l.b16 %v303
        %v337 = vunpack.c.h.b16 %v303
        %v338 = vunpack.c.l.b16 %v304
        %v339 = vunpack.c.h.b16 %v304
        %v340 = vunpack.c.l.b16 %v305
        %v341 = vunpack.c.h.b16 %v305
        %v342 = vunpack.c.l.b16 %v306
        %v343 = vunpack.c.h.b16 %v306
        %v344 = vunpack.c.l.b16 %v307
        %v345 = vunpack.c.h.b16 %v307
        %v346 = vunpack.c.l.b16 %v308
        %v347 = vunpack.c.h.b16 %v308
        %v348 = vunpack.c.l.b16 %v309
        %v349 = vunpack.c.h.b16 %v309
        %v350 = vunpack.c.l.b16 %v310
        %v351 = vunpack.c.h.b16 %v310
        %v352 = vunpack.c.l.b16 %v311
        %v353 = vunpack.c.h.b16 %v311
        %v354 = vunpack.c.l.b16 %v312
        %v355 = vunpack.c.h.b16 %v312
        %v356 = vunpack.c.l.b16 %v313
        %v357 = vunpack.c.h.b16 %v313
        %v358 = vunpack.c.l.b16 %v314
        %v359 = vunpack.c.h.b16 %v314
        %v360 = vunpack.c.l.b16 %v315
        %v361 = vunpack.c.h.b16 %v315
        %v362 = vunpack.c.l.b16 %v316
        %v363 = vunpack.c.h.b16 %v316
        %v364 = vunpack.c.l.b16 %v317
        %v365 = vunpack.c.h.b16 %v317
        %v366 = vpack.c.b16 %v336, %v334
        %v367 = vpack.c.b16 %v337, %v335
        %v368 = vpack.c.b16 %v340, %v338
        %v369 = vpack.c.b16 %v341, %v339
        %v370 = vpack.c.b16 %v344, %v342
        %v371 = vpack.c.b16 %v345, %v343
        %v372 = vpack.c.b16 %v348, %v346
        %v373 = vpack.c.b16 %v349, %v347
        %v374 = vpack.c.b16 %v352, %v350
        %v375 = vpack.c.b16 %v353, %v351
        %v376 = vpack.c.b16 %v356, %v354
        %v377 = vpack.c.b16 %v357, %v355
        %v378 = vpack.c.b16 %v360, %v358
        %v379 = vpack.c.b16 %v361, %v359
        %v380 = vpack.c.b16 %v364, %v362
        %v381 = vpack.c.b16 %v365, %v363
        %398 = vmatprep.subr.bf16.mxu0 %v367
        %399 = vmatpush1.bf16.msra.mxu0 %v366
        %400 = vmatprep.subr.bf16.mxu0 %v369
        %401 = vmatpush1.bf16.msra.mxu0 %v368
        %402 = vmatprep.subr.bf16.mxu0 %v371
        %403 = vmatpush1.bf16.msra.mxu0 %v370
        %404 = vmatprep.subr.bf16.mxu0 %v373
        %405 = vmatpush1.bf16.msra.mxu0 %v372
        %406 = vmatprep.subr.bf16.mxu0 %v375
        %407 = vmatpush1.bf16.msra.mxu0 %v374
        %408 = vmatprep.subr.bf16.mxu0 %v377
        %409 = vmatpush1.bf16.msra.mxu0 %v376
        %410 = vmatprep.subr.bf16.mxu0 %v379
        %411 = vmatpush1.bf16.msra.mxu0 %v378
        %412 = vmatprep.subr.bf16.mxu0 %v381
        %413 = vmatpush1.bf16.msra.mxu0 %v380
        %414 = vmatprep.subr.bf16.mxu0 0
        %415 = vmatpush1.bf16.msra.mxu0 0
        %416 = vmatprep.subr.bf16.mxu0 0
        %417 = vmatpush1.bf16.msra.mxu0 0
        %418 = vmatprep.subr.bf16.mxu0 0
        %419 = vmatpush1.bf16.msra.mxu0 0
        %420 = vmatprep.subr.bf16.mxu0 0
        %421 = vmatpush1.bf16.msra.mxu0 0
        %422 = vmatprep.subr.bf16.mxu0 0
        %423 = vmatpush1.bf16.msra.mxu0 0
        %424 = vmatprep.subr.bf16.mxu0 0
        %425 = vmatpush1.bf16.msra.mxu0 0
        %426 = vmatprep.subr.bf16.mxu0 0
        %427 = vmatpush1.bf16.msra.mxu0 0
        %428 = vmatprep.subr.bf16.mxu0 0
        %429 = vmatpush1.bf16.msra.mxu0 0
        %430 = vmatprep.mubr.bf16.mxu0 0
        %431 = vmatmul.mubr.bf16.gmra.mrb[0].mxu0 %v286
        %v432 = vpop.f32.mrb[0].mxu0
        %v433 = vadd.f32 0.0, %v432
        %v434 = vpop.f32.mrb[0].mxu0
        %v435 = vadd.f32 0.0, %v434
        %v436 = vpop.f32.mrb[0].mxu0
        %v437 = vadd.f32 0.0, %v436
        %v438 = vpop.f32.mrb[0].mxu0
        %v439 = vadd.f32 0.0, %v438
        %440 = vmatprep.mubr.bf16.mxu0 0
        %441 = vmatmul.mubr.bf16.gmra.mrb[0].mxu0 %v287
        %v442 = vpop.f32.mrb[0].mxu0
        %v443 = vadd.f32 0.0, %v442
        %v444 = vpop.f32.mrb[0].mxu0
        %v445 = vadd.f32 0.0, %v444
        %v446 = vpop.f32.mrb[0].mxu0
        %v447 = vadd.f32 0.0, %v446
        %v448 = vpop.f32.mrb[0].mxu0
        %v449 = vadd.f32 0.0, %v448
        %450 = vmatprep.mubr.bf16.mxu0 0
        %451 = vmatmul.mubr.bf16.gmra.mrb[0].mxu0 %v288
        %v452 = vpop.f32.mrb[0].mxu0
        %v453 = vadd.f32 0.0, %v452
        %v454 = vpop.f32.mrb[0].mxu0
        %v455 = vadd.f32 0.0, %v454
        %v456 = vpop.f32.mrb[0].mxu0
        %v457 = vadd.f32 0.0, %v456
        %v458 = vpop.f32.mrb[0].mxu0
        %v459 = vadd.f32 0.0, %v458
        %460 = vmatprep.mubr.bf16.mxu0 0
        %461 = vmatmul.mubr.bf16.gmra.mrb[0].mxu0 %v289
        %v462 = vpop.f32.mrb[0].mxu0
        %v463 = vadd.f32 0.0, %v462
        %v464 = vpop.f32.mrb[0].mxu0
        %v465 = vadd.f32 0.0, %v464
        %v466 = vpop.f32.mrb[0].mxu0
        %v467 = vadd.f32 0.0, %v466
        %v468 = vpop.f32.mrb[0].mxu0
        %v469 = vadd.f32 0.0, %v468
        %470 = vmatprep.mubr.bf16.mxu0 0
        %471 = vmatmul.mubr.bf16.gmra.mrb[0].mxu0 %v290
        %v472 = vpop.f32.mrb[0].mxu0
        %v473 = vadd.f32 0.0, %v472
        %v474 = vpop.f32.mrb[0].mxu0
        %v475 = vadd.f32 0.0, %v474
        %v476 = vpop.f32.mrb[0].mxu0
        %v477 = vadd.f32 0.0, %v476
        %v478 = vpop.f32.mrb[0].mxu0
        %v479 = vadd.f32 0.0, %v478
        %480 = vmatprep.mubr.bf16.mxu0 0
        %481 = vmatmul.mubr.bf16.gmra.mrb[0].mxu0 %v291
        %v482 = vpop.f32.mrb[0].mxu0
        %v483 = vadd.f32 0.0, %v482
        %v484 = vpop.f32.mrb[0].mxu0
        %v485 = vadd.f32 0.0, %v484
        %v486 = vpop.f32.mrb[0].mxu0
        %v487 = vadd.f32 0.0, %v486
        %v488 = vpop.f32.mrb[0].mxu0
        %v489 = vadd.f32 0.0, %v488
        %490 = vmatprep.mubr.bf16.mxu0 0
        %491 = vmatmul.mubr.bf16.gmra.mrb[0].mxu0 %v292
        %v492 = vpop.f32.mrb[0].mxu0
        %v493 = vadd.f32 0.0, %v492
        %v494 = vpop.f32.mrb[0].mxu0
        %v495 = vadd.f32 0.0, %v494
        %v496 = vpop.f32.mrb[0].mxu0
        %v497 = vadd.f32 0.0, %v496
        %v498 = vpop.f32.mrb[0].mxu0
        %v499 = vadd.f32 0.0, %v498
        %500 = vmatprep.mubr.bf16.mxu0 0
        %501 = vmatmul.mubr.bf16.gmra.mrb[0].mxu0 %v293
        %v502 = vpop.f32.mrb[0].mxu0
        %v503 = vadd.f32 0.0, %v502
        %v504 = vpop.f32.mrb[0].mxu0
        %v505 = vadd.f32 0.0, %v504
        %v506 = vpop.f32.mrb[0].mxu0
        %v507 = vadd.f32 0.0, %v506
        %v508 = vpop.f32.mrb[0].mxu0
        %v509 = vadd.f32 0.0, %v508
        %510 = vmatprep.mubr.bf16.mxu0 0
        %511 = vmatmul.mubr.bf16.gmra.mrb[0].mxu0 %v294
        %v512 = vpop.f32.mrb[0].mxu0
        %v513 = vadd.f32 0.0, %v512
        %v514 = vpop.f32.mrb[0].mxu0
        %v515 = vadd.f32 0.0, %v514
        %v516 = vpop.f32.mrb[0].mxu0
        %v517 = vadd.f32 0.0, %v516
        %v518 = vpop.f32.mrb[0].mxu0
        %v519 = vadd.f32 0.0, %v518
        %520 = vmatprep.mubr.bf16.mxu0 0
        %521 = vmatmul.mubr.bf16.gmra.mrb[0].mxu0 %v295
        %v522 = vpop.f32.mrb[0].mxu0
        %v523 = vadd.f32 0.0, %v522
        %v524 = vpop.f32.mrb[0].mxu0
        %v525 = vadd.f32 0.0, %v524
        %v526 = vpop.f32.mrb[0].mxu0
        %v527 = vadd.f32 0.0, %v526
        %v528 = vpop.f32.mrb[0].mxu0
        %v529 = vadd.f32 0.0, %v528
        %530 = vmatprep.mubr.bf16.mxu0 0
        %531 = vmatmul.mubr.bf16.gmra.mrb[0].mxu0 %v296
        %v532 = vpop.f32.mrb[0].mxu0
        %v533 = vadd.f32 0.0, %v532
        %v534 = vpop.f32.mrb[0].mxu0
        %v535 = vadd.f32 0.0, %v534
        %v536 = vpop.f32.mrb[0].mxu0
        %v537 = vadd.f32 0.0, %v536
        %v538 = vpop.f32.mrb[0].mxu0
        %v539 = vadd.f32 0.0, %v538
        %540 = vmatprep.mubr.bf16.mxu0 0
        %541 = vmatmul.mubr.bf16.gmra.mrb[0].mxu0 %v297
        %v542 = vpop.f32.mrb[0].mxu0
        %v543 = vadd.f32 0.0, %v542
        %v544 = vpop.f32.mrb[0].mxu0
        %v545 = vadd.f32 0.0, %v544
        %v546 = vpop.f32.mrb[0].mxu0
        %v547 = vadd.f32 0.0, %v546
        %v548 = vpop.f32.mrb[0].mxu0
        %v549 = vadd.f32 0.0, %v548
        %550 = vmatprep.mubr.bf16.mxu0 0
        %551 = vmatmul.mubr.bf16.gmra.mrb[0].mxu0 %v298
        %v552 = vpop.f32.mrb[0].mxu0
        %v553 = vadd.f32 0.0, %v552
        %v554 = vpop.f32.mrb[0].mxu0
        %v555 = vadd.f32 0.0, %v554
        %v556 = vpop.f32.mrb[0].mxu0
        %v557 = vadd.f32 0.0, %v556
        %v558 = vpop.f32.mrb[0].mxu0
        %v559 = vadd.f32 0.0, %v558
        %560 = vmatprep.mubr.bf16.mxu0 0
        %561 = vmatmul.mubr.bf16.gmra.mrb[0].mxu0 %v299
        %v562 = vpop.f32.mrb[0].mxu0
        %v563 = vadd.f32 0.0, %v562
        %v564 = vpop.f32.mrb[0].mxu0
        %v565 = vadd.f32 0.0, %v564
        %v566 = vpop.f32.mrb[0].mxu0
        %v567 = vadd.f32 0.0, %v566
        %v568 = vpop.f32.mrb[0].mxu0
        %v569 = vadd.f32 0.0, %v568
        %570 = vmatprep.mubr.bf16.mxu0 0
        %571 = vmatmul.mubr.bf16.gmra.mrb[0].mxu0 %v300
        %v572 = vpop.f32.mrb[0].mxu0
        %v573 = vadd.f32 0.0, %v572
        %v574 = vpop.f32.mrb[0].mxu0
        %v575 = vadd.f32 0.0, %v574
        %v576 = vpop.f32.mrb[0].mxu0
        %v577 = vadd.f32 0.0, %v576
        %v578 = vpop.f32.mrb[0].mxu0
        %v579 = vadd.f32 0.0, %v578
        %580 = vmatprep.mubr.bf16.mxu0 0
        %581 = vmatmul.mubr.bf16.gmra.mrb[0].mxu0 %v301
        %v582 = vpop.f32.mrb[0].mxu0
        %v583 = vadd.f32 0.0, %v582
        %v584 = vpop.f32.mrb[0].mxu0
        %v585 = vadd.f32 0.0, %v584
        %v586 = vpop.f32.mrb[0].mxu0
        %v587 = vadd.f32 0.0, %v586
        %v588 = vpop.f32.mrb[0].mxu0
        %v589 = vadd.f32 0.0, %v588
        %590 = vdwg.mxu0
        %v591 = vpack.c.bf16 %v437, %v433
        %v592 = vpack.c.bf16 %v447, %v443
        %v593 = vpack.c.bf16 %v457, %v453
        %v594 = vpack.c.bf16 %v467, %v463
        %v595 = vpack.c.bf16 %v477, %v473
        %v596 = vpack.c.bf16 %v487, %v483
        %v597 = vpack.c.bf16 %v497, %v493
        %v598 = vpack.c.bf16 %v507, %v503
        %v599 = vpack.c.bf16 %v517, %v513
        %v600 = vpack.c.bf16 %v527, %v523
        %v601 = vpack.c.bf16 %v537, %v533
        %v602 = vpack.c.bf16 %v547, %v543
        %v603 = vpack.c.bf16 %v557, %v553
        %v604 = vpack.c.bf16 %v567, %v563
        %v605 = vpack.c.bf16 %v577, %v573
        %v606 = vpack.c.bf16 %v587, %v583
        %v623 = vunpack.c.l.b16 %v591
        %v624 = vunpack.c.h.b16 %v591
        %v625 = vunpack.c.l.b16 %v592
        %v626 = vunpack.c.h.b16 %v592
        %v627 = vunpack.c.l.b16 %v593
        %v628 = vunpack.c.h.b16 %v593
        %v629 = vunpack.c.l.b16 %v594
        %v630 = vunpack.c.h.b16 %v594
        %v631 = vunpack.c.l.b16 %v595
        %v632 = vunpack.c.h.b16 %v595
        %v633 = vunpack.c.l.b16 %v596
        %v634 = vunpack.c.h.b16 %v596
        %v635 = vunpack.c.l.b16 %v597
        %v636 = vunpack.c.h.b16 %v597
        %v637 = vunpack.c.l.b16 %v598
        %v638 = vunpack.c.h.b16 %v598
        %v639 = vunpack.c.l.b16 %v599
        %v640 = vunpack.c.h.b16 %v599
        %v641 = vunpack.c.l.b16 %v600
        %v642 = vunpack.c.h.b16 %v600
        %v643 = vunpack.c.l.b16 %v601
        %v644 = vunpack.c.h.b16 %v601
        %v645 = vunpack.c.l.b16 %v602
        %v646 = vunpack.c.h.b16 %v602
        %v647 = vunpack.c.l.b16 %v603
        %v648 = vunpack.c.h.b16 %v603
        %v649 = vunpack.c.l.b16 %v604
        %v650 = vunpack.c.h.b16 %v604
        %v651 = vunpack.c.l.b16 %v605
        %v652 = vunpack.c.h.b16 %v605
        %v653 = vunpack.c.l.b16 %v606
        %v654 = vunpack.c.h.b16 %v606
        %v655 = vpack.c.b16 %v623, %v623
        %v656 = vpack.c.b16 %v624, %v624
        %v657 = vpack.c.b16 %v625, %v625
        %v658 = vpack.c.b16 %v626, %v626
        %v659 = vpack.c.b16 %v627, %v627
        %v660 = vpack.c.b16 %v628, %v628
        %v661 = vpack.c.b16 %v629, %v629
        %v662 = vpack.c.b16 %v630, %v630
        %v663 = vpack.c.b16 %v631, %v631
        %v664 = vpack.c.b16 %v632, %v632
        %v665 = vpack.c.b16 %v633, %v633
        %v666 = vpack.c.b16 %v634, %v634
        %v667 = vpack.c.b16 %v635, %v635
        %v668 = vpack.c.b16 %v636, %v636
        %v669 = vpack.c.b16 %v637, %v637
        %v670 = vpack.c.b16 %v638, %v638
        %v671 = vpack.c.b16 %v639, %v639
        %v672 = vpack.c.b16 %v640, %v640
        %v673 = vpack.c.b16 %v641, %v641
        %v674 = vpack.c.b16 %v642, %v642
        %v675 = vpack.c.b16 %v643, %v643
        %v676 = vpack.c.b16 %v644, %v644
        %v677 = vpack.c.b16 %v645, %v645
        %v678 = vpack.c.b16 %v646, %v646
        %v679 = vpack.c.b16 %v647, %v647
        %v680 = vpack.c.b16 %v648, %v648
        %v681 = vpack.c.b16 %v649, %v649
        %v682 = vpack.c.b16 %v650, %v650
        %v683 = vpack.c.b16 %v651, %v651
        %v684 = vpack.c.b16 %v652, %v652
        %v685 = vpack.c.b16 %v653, %v653
        %v686 = vpack.c.b16 %v654, %v654
        %719 = vst [vmem:[%s234] sm:$0xf] %v655
        %720 = vst [vmem:[%s234 + $0x4] sm:$0xf] %v656
        %721 = vst [vmem:[%s234 + $0x8] sm:$0xf] %v657
        %722 = vst [vmem:[%s234 + $0xc] sm:$0xf] %v658
        %723 = vst [vmem:[%s234 + $0x10] sm:$0xf] %v659
        %724 = vst [vmem:[%s234 + $0x14] sm:$0xf] %v660
        %725 = vst [vmem:[%s234 + $0x18] sm:$0xf] %v661
        %726 = vst [vmem:[%s234 + $0x1c] sm:$0xf] %v662
        %727 = vst [vmem:[%s234 + $0x20] sm:$0xf] %v663
        %728 = vst [vmem:[%s234 + $0x24] sm:$0xf] %v664
        %729 = vst [vmem:[%s234 + $0x28] sm:$0xf] %v665
        %730 = vst [vmem:[%s234 + $0x2c] sm:$0xf] %v666
        %731 = vst [vmem:[%s234 + $0x30] sm:$0xf] %v667
        %732 = vst [vmem:[%s234 + $0x34] sm:$0xf] %v668
        %733 = vst [vmem:[%s234 + $0x38] sm:$0xf] %v669
        %734 = vst [vmem:[%s234 + $0x3c] sm:$0xf] %v670
        %735 = vst [vmem:[%s234 + $0x40] sm:$0xf] %v671
        %736 = vst [vmem:[%s234 + $0x44] sm:$0xf] %v672
        %737 = vst [vmem:[%s234 + $0x48] sm:$0xf] %v673
        %738 = vst [vmem:[%s234 + $0x4c] sm:$0xf] %v674
        %739 = vst [vmem:[%s234 + $0x50] sm:$0xf] %v675
        %740 = vst [vmem:[%s234 + $0x54] sm:$0xf] %v676
        %741 = vst [vmem:[%s234 + $0x58] sm:$0xf] %v677
        %742 = vst [vmem:[%s234 + $0x5c] sm:$0xf] %v678
        %743 = vst [vmem:[%s234 + $0x60] sm:$0xf] %v679
        %744 = vst [vmem:[%s234 + $0x64] sm:$0xf] %v680
        %745 = vst [vmem:[%s234 + $0x68] sm:$0xf] %v681
        %746 = vst [vmem:[%s234 + $0x6c] sm:$0xf] %v682
        %747 = vst [vmem:[%s234 + $0x70] sm:$0xf] %v683
        %748 = vst [vmem:[%s234 + $0x74] sm:$0xf] %v684
        %749 = vst [vmem:[%s234 + $0x78] sm:$0xf] %v685
        %750 = vst [vmem:[%s234 + $0x7c] sm:$0xf] %v686
        %751 = vst [vmem:[%s241] sm:$0xff] %v435
        %752 = vst [vmem:[%s241 + $0x8] sm:$0xff] %v439
        %753 = vst [vmem:[%s241 + $0x10] sm:$0xff] %v445
        %754 = vst [vmem:[%s241 + $0x18] sm:$0xff] %v449
        %755 = vst [vmem:[%s241 + $0x20] sm:$0xff] %v455
        %756 = vst [vmem:[%s241 + $0x28] sm:$0xff] %v459
        %757 = vst [vmem:[%s241 + $0x30] sm:$0xff] %v465
        %758 = vst [vmem:[%s241 + $0x38] sm:$0xff] %v469
        %759 = vst [vmem:[%s241 + $0x40] sm:$0xff] %v475
        %760 = vst [vmem:[%s241 + $0x48] sm:$0xff] %v479
        %761 = vst [vmem:[%s241 + $0x50] sm:$0xff] %v485
        %762 = vst [vmem:[%s241 + $0x58] sm:$0xff] %v489
        %763 = vst [vmem:[%s241 + $0x60] sm:$0xff] %v495
        %764 = vst [vmem:[%s241 + $0x68] sm:$0xff] %v499
        %765 = vst [vmem:[%s241 + $0x70] sm:$0xff] %v505
        %766 = vst [vmem:[%s241 + $0x78] sm:$0xff] %v509
        %767 = vst [vmem:[%s241 + $0x80] sm:$0xff] %v515
        %768 = vst [vmem:[%s241 + $0x88] sm:$0xff] %v519
        %769 = vst [vmem:[%s241 + $0x90] sm:$0xff] %v525
        %770 = vst [vmem:[%s241 + $0x98] sm:$0xff] %v529
        %771 = vst [vmem:[%s241 + $0xa0] sm:$0xff] %v535
        %772 = vst [vmem:[%s241 + $0xa8] sm:$0xff] %v539
        %773 = vst [vmem:[%s241 + $0xb0] sm:$0xff] %v545
        %774 = vst [vmem:[%s241 + $0xb8] sm:$0xff] %v549
        %775 = vst [vmem:[%s241 + $0xc0] sm:$0xff] %v555
        %776 = vst [vmem:[%s241 + $0xc8] sm:$0xff] %v559
        %777 = vst [vmem:[%s241 + $0xd0] sm:$0xff] %v565
        %778 = vst [vmem:[%s241 + $0xd8] sm:$0xff] %v569
        %779 = vst [vmem:[%s241 + $0xe0] sm:$0xff] %v575
        %780 = vst [vmem:[%s241 + $0xe8] sm:$0xff] %v579
        %781 = vst [vmem:[%s241 + $0xf0] sm:$0xff] %v585
        %782 = vst [vmem:[%s241 + $0xf8] sm:$0xff] %v589
        %783 = vxpose.xlu0.b32.start [1/16] %v435, 128
        %784 = vxpose.xlu0.b32.cont [2/16] %v439, 128
        %785 = vxpose.xlu0.b32.cont [3/16] %v445, 128
        %786 = vxpose.xlu0.b32.cont [4/16] %v449, 128
        %787 = vxpose.xlu0.b32.cont [5/16] %v455, 128
        %788 = vxpose.xlu0.b32.cont [6/16] %v459, 128
        %789 = vxpose.xlu0.b32.cont [7/16] %v465, 128
        %790 = vxpose.xlu0.b32.cont [8/16] %v469, 128
        %791 = vxpose.xlu0.b32.cont [9/16] %v475, 128
        %792 = vxpose.xlu0.b32.cont [10/16] %v479, 128
        %793 = vxpose.xlu0.b32.cont [11/16] %v485, 128
        %794 = vxpose.xlu0.b32.cont [12/16] %v489, 128
        %795 = vxpose.xlu0.b32.cont [13/16] %v495, 128
        %796 = vxpose.xlu0.b32.cont [14/16] %v499, 128
        %797 = vxpose.xlu0.b32.cont [15/16] %v505, 128
        %798 = vxpose.xlu0.b32.end [16/16] %v509, 128
        %v799 = vpop.trf.xlu0
        %v800 = vpop.trf.xlu0
        %v801 = vpop.trf.xlu0
        %v802 = vpop.trf.xlu0
        %v803 = vpop.trf.xlu0
        %v804 = vpop.trf.xlu0
        %v805 = vpop.trf.xlu0
        %v806 = vpop.trf.xlu0
        %v807 = vpop.trf.xlu0
        %v808 = vpop.trf.xlu0
        %v809 = vpop.trf.xlu0
        %v810 = vpop.trf.xlu0
        %v811 = vpop.trf.xlu0
        %v812 = vpop.trf.xlu0
        %v813 = vpop.trf.xlu0
        %v814 = vpop.trf.xlu0
        %815 = vxpose.xlu0.b32.start [1/16] %v515, 128
        %816 = vxpose.xlu0.b32.cont [2/16] %v519, 128
        %817 = vxpose.xlu0.b32.cont [3/16] %v525, 128
        %818 = vxpose.xlu0.b32.cont [4/16] %v529, 128
        %819 = vxpose.xlu0.b32.cont [5/16] %v535, 128
        %820 = vxpose.xlu0.b32.cont [6/16] %v539, 128
        %821 = vxpose.xlu0.b32.cont [7/16] %v545, 128
        %822 = vxpose.xlu0.b32.cont [8/16] %v549, 128
        %823 = vxpose.xlu0.b32.cont [9/16] %v555, 128
        %824 = vxpose.xlu0.b32.cont [10/16] %v559, 128
        %825 = vxpose.xlu0.b32.cont [11/16] %v565, 128
        %826 = vxpose.xlu0.b32.cont [12/16] %v569, 128
        %827 = vxpose.xlu0.b32.cont [13/16] %v575, 128
        %828 = vxpose.xlu0.b32.cont [14/16] %v579, 128
        %829 = vxpose.xlu0.b32.cont [15/16] %v585, 128
        %830 = vxpose.xlu0.b32.end [16/16] %v589, 128
        %v831 = vpop.trf.xlu0
        %v832 = vpop.trf.xlu0
        %v833 = vpop.trf.xlu0
        %v834 = vpop.trf.xlu0
        %v835 = vpop.trf.xlu0
        %v836 = vpop.trf.xlu0
        %v837 = vpop.trf.xlu0
        %v838 = vpop.trf.xlu0
        %v839 = vpop.trf.xlu0
        %v840 = vpop.trf.xlu0
        %v841 = vpop.trf.xlu0
        %v842 = vpop.trf.xlu0
        %v843 = vpop.trf.xlu0
        %v844 = vpop.trf.xlu0
        %v845 = vpop.trf.xlu0
        %v846 = vpop.trf.xlu0
        %847 = vst [vmem:[%s248] sm:$0xff] %v799
        %848 = vst [vmem:[%s248 + $0x8] sm:$0xff] %v831
        %s849 = sand.u32 %s81, 1
        %s850 = scalar_lea.sflag [#allocation4], %s849
        %s851 = sand.u32 %s81, 1
        %s852 = smul.addr %s851, 128
        %s853 = scalar_lea.vmem [#allocation7], %s852
        %s854 = sand.u32 %s26, 1
        %s855 = scalar_lea.sflag [#allocation9], %s854
        %s856 = sand.u32 %s107, 1
        %s857 = smul.addr %s856, 256
        %s858 = scalar_lea.vmem [#allocation8], %s857
        %s859 = sand.u32 %s26, 1
        %s860 = scalar_lea.sflag [#allocation9], %s859
        %s861 = sand.u32 %s133, 1
        %s862 = smul.addr %s861, 16
        %s863 = scalar_lea.vmem [#allocation10], %s862
        // Predicated region
        $region37: #{tpu_custom_call.1} parent=27 // pred_check
          %p864 = pneg %p91
        $region38: #{tpu_custom_call.1} parent=27 // pred_check_branch
          %866 = sbr.rel (%p864) target = $region40
        $region39: #{tpu_custom_call.1} parent=27 // pred_region
          %s867 = smul.u32 32, %s26
          %s869 = ssub.s32 2048, 2048
          %870 = vsyncadd %s850, %s869
          %s871 = smul.addr %s867, 64
          %s872 = scalar_lea.hbm %s2, %s871
          %s873 = sshll.u32 %s853, 4
          %s874 = int_to_ptr.vmem [resolvable:$true] %s873
          %879 = dma.vmem_to_hbm [thread:$0]  %s874, 2048, %s872, %s850, 64, 64, 4
        $region40: #{tpu_custom_call.1} parent=27 // pred_fallthru
          _
        // Predicated region
        $region41: #{tpu_custom_call.1} parent=27 // pred_check
          %p880 = pneg %p117
        $region42: #{tpu_custom_call.1} parent=27 // pred_check_branch
          %882 = sbr.rel (%p880) target = $region44
        $region43: #{tpu_custom_call.1} parent=27 // pred_region
          %s883 = smul.u32 32, %s26
          %s885 = ssub.s32 4096, 4096
          %886 = vsyncadd %s855, %s885
          %s887 = smul.addr %s883, 128
          %s888 = scalar_lea.hbm %s3, %s887
          %s889 = sshll.u32 %s858, 4
          %s890 = int_to_ptr.vmem [resolvable:$true] %s889
          %895 = dma.vmem_to_hbm [thread:$0]  %s890, 4096, %s888, %s855, 128, 128, 8
        $region44: #{tpu_custom_call.1} parent=27 // pred_fallthru
          _
        // Predicated region
        $region45: #{tpu_custom_call.1} parent=27 // pred_check
          %p896 = pneg %p143
        $region46: #{tpu_custom_call.1} parent=27 // pred_check_branch
          %898 = sbr.rel (%p896) target = $region48
        $region47: #{tpu_custom_call.1} parent=27 // pred_region
          %s899 = smul.u32 2, %s26
          %s901 = ssub.s32 256, 256
          %902 = vsyncadd %s860, %s901
          %s903 = smul.addr %s899, 128
          %s904 = scalar_lea.hbm %s4, %s903
          %s906 = sshll.u32 %s863, 4
          %s907 = int_to_ptr.vmem [resolvable:$true] %s906
          %909 = dma.vmem_to_hbm [thread:$0]  %s907, 256, %s904, %s860
        $region48: #{tpu_custom_call.1} parent=27 // pred_fallthru
          _
      $region28: #{tpu_custom_call.1} parent=5 // pred_fallthru
        _
      %p910 = scmp.le.s32.totalorder 2, %s21
      // Predicated region
      $region49: #{tpu_custom_call.1} parent=5 // pred_check
        %p911 = pneg %p910
      $region50: #{tpu_custom_call.1} parent=5 // pred_check_branch
        %913 = sbr.rel (%p911) target = $region52
      $region51: #{tpu_custom_call.1} parent=5 // pred_region
        %s914 = ssub.s32 %s21, 2
        // Predicated region
        $region53: #{tpu_custom_call.1} parent=51 // pred_check
          %p915 = pneg %p97
        $region54: #{tpu_custom_call.1} parent=51 // pred_check_branch
          %917 = sbr.rel (%p915) target = $region56
        $region55: #{tpu_custom_call.1} parent=51 // pred_region
          %s918 = sand.u32 %s82, 1
          %s919 = scalar_lea.sflag [#allocation4], %s918
          %s920 = sand.u32 %s82, 1
          %s921 = smul.addr %s920, 128
          %s922 = scalar_lea.vmem [#allocation7], %s921
          %923 = dma.done %s919, 2048
        $region56: #{tpu_custom_call.1} parent=51 // pred_fallthru
          _
        // Predicated region
        $region57: #{tpu_custom_call.1} parent=51 // pred_check
          %p924 = pneg %p123
        $region58: #{tpu_custom_call.1} parent=51 // pred_check_branch
          %926 = sbr.rel (%p924) target = $region60
        $region59: #{tpu_custom_call.1} parent=51 // pred_region
          %s927 = sand.u32 %s27, 1
          %s928 = scalar_lea.sflag [#allocation9], %s927
          %s929 = sand.u32 %s108, 1
          %s930 = smul.addr %s929, 256
          %s931 = scalar_lea.vmem [#allocation8], %s930
          %932 = dma.done %s928, 4096
        $region60: #{tpu_custom_call.1} parent=51 // pred_fallthru
          _
        // Predicated region
        $region61: #{tpu_custom_call.1} parent=51 // pred_check
          %p933 = pneg %p149
        $region62: #{tpu_custom_call.1} parent=51 // pred_check_branch
          %935 = sbr.rel (%p933) target = $region64
        $region63: #{tpu_custom_call.1} parent=51 // pred_region
          %s936 = sand.u32 %s27, 1
          %s937 = scalar_lea.sflag [#allocation9], %s936
          %s938 = sand.u32 %s134, 1
          %s939 = smul.addr %s938, 16
          %s940 = scalar_lea.vmem [#allocation10], %s939
          %941 = dma.done %s937, 256
        $region64: #{tpu_custom_call.1} parent=51 // pred_fallthru
          _
      $region52: #{tpu_custom_call.1} parent=5 // pred_fallthru
        _
    $region6: #{tpu_custom_call.1} parent=1 // loop_footer
      %s25 = sadd.s32 1, %s21
    $region7: #{tpu_custom_call.1} parent=1 // loop_footer_branch
      %20 = sbr.rel target = $region3
    $region8: #{tpu_custom_call.1} parent=1 // loop_exit
      _
    %942 = vsyncpa [#allocation3], 1
    %s943 = scalar_lea.sflag [#allocation3], 1
    %944 = vsyncpa %s943, 1
    %945 = vsyncpa [#allocation6], 1
    %946 = vsyncpa [#allocation4], 1
    %s947 = scalar_lea.sflag [#allocation4], 1
    %948 = vsyncpa %s947, 1
    %949 = vsyncpa [#allocation9], 1
    %s950 = scalar_lea.sflag [#allocation9], 1
    %951 = vsyncpa %s950, 1

</llo_original>
